<compile_context>
chip_gen: v7x
topology: tpu7x:2x2x1
jax: 0.10.0
libtpu: 0.0.40
codegen_flags: <defaults>
</compile_context>

<pallas_src>
import functools
import math

import jax
import jax.numpy as jnp
from jax.experimental import pallas as pl
from jax.experimental.pallas import tpu as pltpu


# ----------------------------------------------------------------------------
# Kernel 1: fused QKV projection (runs once over x, not per attention step)
# ----------------------------------------------------------------------------
def qkv_proj_kernel(x_ref, w_ref, q_ref, kv_ref):
    # x_ref : (1, tp, C)   input rows (f32; cast to bf16 in-kernel)
    # w_ref : (C, 3C) bf16 packed [Wq * Dh**-0.5 | Wk | Wv], head-major columns
    # q_ref : (1, tp, C)  bf16 pre-scaled queries
    # kv_ref: (1, tp, 2C) bf16 packed keys (cols [0,C)) | values (cols [C,2C))
    C = q_ref.shape[2]
    x = x_ref[0].astype(jnp.bfloat16)
    qkv = jnp.dot(x, w_ref[...], preferred_element_type=jnp.float32)
    q_ref[0] = qkv[:, :C].astype(q_ref.dtype)
    kv_ref[0] = qkv[:, C:].astype(kv_ref.dtype)


# ----------------------------------------------------------------------------
# Kernel 2: flash attention (online softmax) + fused output projection
# ----------------------------------------------------------------------------
def mha_attn_kernel(q_ref, kv_ref, wp_ref, bp_ref, o_ref,
                    m_sc, l_sc, acc_sc, *, H, Dh):
    # q_ref : (1, tq, C)  bf16 pre-scaled queries of this tile
    # kv_ref: (1, tk, 2C) bf16 keys (cols [0,C)) | values (cols [C,2C))
    # wp_ref: (C, C)      bf16 output projection (in, out)
    # bp_ref: (1, C)      f32  output projection bias
    # o_ref : (1, tq, C)
    # m_sc  : (tq, H) f32 running max       (head h -> column h)
    # l_sc  : (tq, H) f32 running denominator
    # acc_sc: (tq, C) f32 running numerator (head h -> cols [h*Dh,(h+1)*Dh))
    qi = pl.program_id(1)
    ki = pl.program_id(2)
    nk = pl.num_programs(2)

    tq = q_ref.shape[1]
    tk = kv_ref.shape[1]
    C = q_ref.shape[2]

    q_start = qi * tq
    k_start = ki * tk
    # Index of the last KV tile that intersects the causal lower triangle for
    # this query tile (matches the wrapper-side DMA clamp).
    kv_last = jnp.minimum(nk - 1, (q_start + tq - 1) // tk)

    @pl.when(ki == 0)
    def _init():
        m_sc[...] = jnp.full_like(m_sc, -jnp.inf)
        l_sc[...] = jnp.zeros_like(l_sc)
        acc_sc[...] = jnp.zeros_like(acc_sc)

    @pl.when(ki <= kv_last)
    def _attend():
        rows = q_start + jax.lax.broadcasted_iota(jnp.int32, (tq, tk), 0)
        cols = k_start + jax.lax.broadcasted_iota(jnp.int32, (tq, tk), 1)
        causal = rows >= cols
        neg = jnp.float32(-1e30)

        q = q_ref[0]     # (tq, C)  bf16, already scaled by Dh**-0.5
        kv = kv_ref[0]   # (tk, 2C) bf16

        for h in range(H):   # static unroll; fine for small H (see TODO)
            q_h = q[:, h * Dh:(h + 1) * Dh]                 # (tq, Dh)
            k_h = kv[:, h * Dh:(h + 1) * Dh]                # (tk, Dh)
            v_h = kv[:, C + h * Dh:C + (h + 1) * Dh]        # (tk, Dh)

            s = jnp.einsum("qd,kd->qk", q_h, k_h,
                           preferred_element_type=jnp.float32)   # (tq, tk) f32
            s = jnp.where(causal, s, neg)

            m_prev = m_sc[:, h:h + 1]                             # (tq, 1)
            m_new = jnp.maximum(m_prev, jnp.max(s, axis=-1, keepdims=True))
            alpha = jnp.exp(m_prev - m_new)
            p = jnp.exp(s - m_new)                                # (tq, tk) f32

            l_sc[:, h:h + 1] = (alpha * l_sc[:, h:h + 1] +
                                jnp.sum(p, axis=-1, keepdims=True))
            acc_sc[:, h * Dh:(h + 1) * Dh] = (
                alpha * acc_sc[:, h * Dh:(h + 1) * Dh] +
                jnp.dot(p.astype(jnp.bfloat16), v_h,
                        preferred_element_type=jnp.float32))
            m_sc[:, h:h + 1] = m_new

    @pl.when(ki == kv_last)
    def _finalize():
        # Normalize in the lane-packed layout, then ONE fused (tq,C)@(C,C)
        # output-projection matmul (== concat(heads) @ Wp + b).
        inv_l = pl.reciprocal(l_sc[...], approx=True)             # (tq, H)
        for h in range(H):
            acc_sc[:, h * Dh:(h + 1) * Dh] *= inv_l[:, h:h + 1]
        y = jnp.dot(acc_sc[...].astype(jnp.bfloat16), wp_ref[...],
                    preferred_element_type=jnp.float32) + bp_ref[0]
        o_ref[0] = y.astype(o_ref.dtype)
        # TODO(synk): training-mode dropout (random masking) not implemented.


# ----------------------------------------------------------------------------
# Wrappers
# ----------------------------------------------------------------------------
def pack_mha_weights(wq, wk, wv, wp, bp):
    """One-time packing of per-head weights into kernel layouts.

    wq/wk/wv: (H, C, Dh)  per-head Linear(C, Dh, bias=False) weights (in, out)
    wp:       (C, C)      output projection (in, out)
    bp:       (1, C)      output projection bias
    Hoisted out of the per-call path so transposes/concats/bf16 casts are not
    re-executed (and re-materialized in HBM) on every forward call.
    """
    H, C, Dh = wq.shape
    assert H * Dh == C
    scale = 1.0 / math.sqrt(Dh)
    # (H, C, Dh) -> (C, H*Dh): head h occupies output columns [h*Dh,(h+1)*Dh).
    wq_cat = jnp.transpose(wq, (1, 0, 2)).reshape(C, C) * scale   # fold scale
    wk_cat = jnp.transpose(wk, (1, 0, 2)).reshape(C, C)
    wv_cat = jnp.transpose(wv, (1, 0, 2)).reshape(C, C)
    w_qkv = jnp.concatenate([wq_cat, wk_cat, wv_cat],
                            axis=-1).astype(jnp.bfloat16)          # (C, 3C)
    return dict(w_qkv=w_qkv, wp=wp.astype(jnp.bfloat16),
                bp=bp.astype(jnp.float32), H=int(H), Dh=int(Dh))


def qkv_projection(x, w_qkv, *, tp=None):
    B, T, C = x.shape
    if tp is None:
        tp = T if T <= 256 else 256
    assert T % tp == 0
    return pl.pallas_call(
        qkv_proj_kernel,
        out_shape=(jax.ShapeDtypeStruct((B, T, C), jnp.bfloat16),
                   jax.ShapeDtypeStruct((B, T, 2 * C), jnp.bfloat16)),
        grid=(B, T // tp),
        in_specs=[
            pl.BlockSpec((1, tp, C), lambda b, ti: (b, ti, 0)),     # x
            pl.BlockSpec((C, 3 * C), lambda b, ti: (0, 0)),          # Wqkv
        ],
        out_specs=(
            pl.BlockSpec((1, tp, C), lambda b, ti: (b, ti, 0)),      # q
            pl.BlockSpec((1, tp, 2 * C), lambda b, ti: (b, ti, 0)),  # kv
        ),
        compiler_params=pltpu.CompilerParams(
            dimension_semantics=("parallel", "parallel"),
            vmem_limit_bytes=64 * 1024 * 1024,
        ),
    )(x, w_qkv)


def multi_head_attention(x, packed, *, tq=None, tk=None):
    """x: (B, T, C); packed: output of pack_mha_weights."""
    B, T, C = x.shape
    H, Dh = packed["H"], packed["Dh"]
    assert H * Dh == C

    if tq is None:
        tq = T if T <= 256 else 256
    if tk is None:
        tk = T if T <= 256 else 256
    assert T % tq == 0 and T % tk == 0
    assert (tq == T or tq % 8 == 0) and (tk == T or tk % 8 == 0)
    # TODO(synk): for production shapes pad C to a multiple of 128 so output
    # stores are lane-dense (toy C=32 uses full-dim blocks / masked stores).

    # Stage 1: QKV projection, once over the sequence (not per attention step).
    q, kv = qkv_projection(x, packed["w_qkv"])

    grid = (B, T // tq, T // tk)

    def q_map(b, qi, ki):
        return (b, qi, 0)

    def kv_map(b, qi, ki):
        # Clamp to the last attended KV tile for this query tile: on
        # causally-skipped (upper-triangle) steps the block index does not
        # change, so Pallas issues no new HBM DMA for data _attend never uses.
        return (b, jnp.minimum(ki, (qi * tq + tq - 1) // tk), 0)

    kernel = functools.partial(mha_attn_kernel, H=H, Dh=Dh)
    return pl.pallas_call(
        kernel,
        out_shape=jax.ShapeDtypeStruct((B, T, C), x.dtype),
        grid=grid,
        in_specs=[
            pl.BlockSpec((1, tq, C), q_map),                       # q (scaled)
            pl.BlockSpec((1, tk, 2 * C), kv_map),                  # packed k|v
            pl.BlockSpec((C, C), lambda b, qi, ki: (0, 0)),        # Wp
            pl.BlockSpec((1, C), lambda b, qi, ki: (0, 0)),        # bias
        ],
        out_specs=pl.BlockSpec((1, tq, C), q_map),
        scratch_shapes=[
            pltpu.VMEM((tq, H), jnp.float32),   # running max   (lane-dense)
            pltpu.VMEM((tq, H), jnp.float32),   # running denom (lane-dense)
            pltpu.VMEM((tq, C), jnp.float32),   # running numerator (tq, C)
        ],
        compiler_params=pltpu.CompilerParams(
            dimension_semantics=("parallel", "parallel", "arbitrary"),
            # 64 MiB scoped VMEM: sweep tq/tk upward on v6e (128 MiB phys);
            # keep <= ~48 MiB and single-buffer weight blocks on v7x.
            vmem_limit_bytes=64 * 1024 * 1024,
        ),
    )(q, kv, packed["wp"], packed["bp"])


# ----------------------------------------------------------------------------
# Pure-JAX reference (f32 math) for verification
# ----------------------------------------------------------------------------
def mha_reference(x, wq, wk, wv, wp, bp):
    B, T, C = x.shape
    H, _, Dh = wq.shape
    q = jnp.einsum("btc,hcd->bhtd", x, wq)
    k = jnp.einsum("btc,hcd->bhtd", x, wk)
    v = jnp.einsum("btc,hcd->bhtd", x, wv)
    s = jnp.einsum("bhqd,bhkd->bhqk", q, k) / math.sqrt(Dh)
    mask = jnp.tril(jnp.ones((T, T), bool))
    s = jnp.where(mask, s, -jnp.inf)
    p = jax.nn.softmax(s, axis=-1)
    o = jnp.einsum("bhqk,bhkd->bhqd", p, v)
    o = jnp.transpose(o, (0, 2, 1, 3)).reshape(B, T, C)   # concat heads
    return o @ wp + bp[0]


if __name__ == "__main__":
    # Hyperparameters (synthetic, deterministic)
    B, T = 2, 8          # batch, sequence length (block_size)
    C = 32               # num_dim
    H = 4                # num_head
    Dh = C // H          # head size
    # dropout p = 0.0 (inference) -> identity

    key = jax.random.PRNGKey(0)
    k_x, k_q, k_k, k_v, k_p, k_b = jax.random.split(key, 6)

    x = jax.random.normal(k_x, (B, T, C), dtype=jnp.float32)
    wq = jax.random.normal(k_q, (H, C, Dh), dtype=jnp.float32) * (1.0 / math.sqrt(C))
    wk = jax.random.normal(k_k, (H, C, Dh), dtype=jnp.float32) * (1.0 / math.sqrt(C))
    wv = jax.random.normal(k_v, (H, C, Dh), dtype=jnp.float32) * (1.0 / math.sqrt(C))
    wp = jax.random.normal(k_p, (C, C), dtype=jnp.float32) * (1.0 / math.sqrt(C))
    bp = jax.random.normal(k_b, (1, C), dtype=jnp.float32) * 0.01

    packed = pack_mha_weights(wq, wk, wv, wp, bp)   # one-time packing (hoisted)
    out = multi_head_attention(x, packed)
    out = jax.block_until_ready(out)
    assert out.shape == (B, T, C)

    # Compare against a pure-JAX reference evaluated on bf16-rounded inputs
    # (the kernel runs its matmuls in bf16 with f32 accumulation).
    rnd = lambda a: a.astype(jnp.bfloat16).astype(jnp.float32)
    ref = mha_reference(rnd(x), rnd(wq), rnd(wk), rnd(wv), rnd(wp), bp)
    err = float(jnp.max(jnp.abs(out - ref)))
    assert err < 1e-1, f"mismatch vs reference: max abs err = {err}"

    print("KERNEL_OK")
</pallas_src>

<mosaic_0001>
module attributes {stable_mosaic.version = 11 : i64} {
  func.func @qkv_proj_kernel(%arg0: i32, %arg1: i32, %arg2: memref<1x8x32xf32, #tpu.memory_space<vmem>>, %arg3: memref<32x96xbf16, #tpu.memory_space<vmem>>, %arg4: memref<1x8x32xbf16, #tpu.memory_space<vmem>>, %arg5: memref<1x8x64xbf16, #tpu.memory_space<vmem>>) attributes {dimension_semantics = [#tpu.dimension_semantics<parallel>, #tpu.dimension_semantics<parallel>], iteration_bounds = array<i64: 2, 1>, scalar_prefetch = 0 : i64, scratch_operands = 0 : i64, tpu.core_type = #tpu.core_type<tc>, window_params = [{transform_indices = @transform_0, window_bounds = array<i64: 1, 8, 32>}, {pipeline_mode = #tpu.pipeline_mode<synchronous>, transform_indices = @transform_1, window_bounds = array<i64: 32, 96>}, {transform_indices = @transform_2, window_bounds = array<i64: 1, 8, 32>}, {transform_indices = @transform_3, window_bounds = array<i64: 1, 8, 64>}]} {
    %c0 = arith.constant 0 : index
    %c0_0 = arith.constant 0 : index
    %c0_1 = arith.constant 0 : index
    %0 = vector.load %arg2[%c0, %c0_0, %c0_1] : memref<1x8x32xf32, #tpu.memory_space<vmem>>, vector<1x8x32xf32>
    %1 = vector.shape_cast %0 : vector<1x8x32xf32> to vector<8x32xf32>
    %2 = arith.truncf %1 : vector<8x32xf32> to vector<8x32xbf16>
    %c0_2 = arith.constant 0 : index
    %c0_3 = arith.constant 0 : index
    %3 = vector.load %arg3[%c0_2, %c0_3] : memref<32x96xbf16, #tpu.memory_space<vmem>>, vector<32x96xbf16>
    %cst = arith.constant dense<0.000000e+00> : vector<8x96xf32>
    %4 = tpu.matmul %2, %3, %cst {dimension_numbers = #tpu.dot_dimension_numbers<[1], [0], [0], [1], [0, 0, 1, 1], [], []>} : vector<8x32xbf16>, vector<32x96xbf16>, vector<8x96xf32> -> vector<8x96xf32>
    %5 = vector.extract_strided_slice %4 {offsets = [0, 0], sizes = [8, 32], strides = [1, 1]} : vector<8x96xf32> to vector<8x32xf32>
    %6 = arith.truncf %5 : vector<8x32xf32> to vector<8x32xbf16>
    %c0_4 = arith.constant 0 : index
    %c0_5 = arith.constant 0 : index
    %c0_6 = arith.constant 0 : index
    %7 = vector.load %arg4[%c0_4, %c0_5, %c0_6] : memref<1x8x32xbf16, #tpu.memory_space<vmem>>, vector<1x8x32xbf16>
    %8 = vector.shape_cast %7 : vector<1x8x32xbf16> to vector<8x32xbf16>
    %9 = vector.shape_cast %6 : vector<8x32xbf16> to vector<1x8x32xbf16>
    tpu.vector_store %arg4[%c0_4, %c0_5, %c0_6], %9 {strides = array<i32>} : memref<1x8x32xbf16, #tpu.memory_space<vmem>>, vector<1x8x32xbf16>,
    %10 = vector.extract_strided_slice %4 {offsets = [0, 32], sizes = [8, 64], strides = [1, 1]} : vector<8x96xf32> to vector<8x64xf32>
    %11 = arith.truncf %10 : vector<8x64xf32> to vector<8x64xbf16>
    %c0_7 = arith.constant 0 : index
    %c0_8 = arith.constant 0 : index
    %c0_9 = arith.constant 0 : index
    %12 = vector.load %arg5[%c0_7, %c0_8, %c0_9] : memref<1x8x64xbf16, #tpu.memory_space<vmem>>, vector<1x8x64xbf16>
    %13 = vector.shape_cast %12 : vector<1x8x64xbf16> to vector<8x64xbf16>
    %14 = vector.shape_cast %11 : vector<8x64xbf16> to vector<1x8x64xbf16>
    tpu.vector_store %arg5[%c0_7, %c0_8, %c0_9], %14 {strides = array<i32>} : memref<1x8x64xbf16, #tpu.memory_space<vmem>>, vector<1x8x64xbf16>,
    return
  }
  func.func @transform_0(%arg0: i32, %arg1: i32) -> (i32, i32, i32) {
    %c0_i32 = arith.constant 0 : i32
    %c0_i32_0 = arith.constant 0 : i32
    return %arg0, %arg1, %c0_i32 : i32, i32, i32
  }
  func.func @transform_1(%arg0: i32, %arg1: i32) -> (i32, i32) {
    %c0_i32 = arith.constant 0 : i32
    %c0_i32_0 = arith.constant 0 : i32
    %c0_i32_1 = arith.constant 0 : i32
    return %c0_i32, %c0_i32_0 : i32, i32
  }
  func.func @transform_2(%arg0: i32, %arg1: i32) -> (i32, i32, i32) {
    %c0_i32 = arith.constant 0 : i32
    %c0_i32_0 = arith.constant 0 : i32
    return %arg0, %arg1, %c0_i32 : i32, i32, i32
  }
  func.func @transform_3(%arg0: i32, %arg1: i32) -> (i32, i32, i32) {
    %c0_i32 = arith.constant 0 : i32
    %c0_i32_0 = arith.constant 0 : i32
    return %arg0, %arg1, %c0_i32 : i32, i32, i32
  }
}

</mosaic_0001>

<llo_original>
// kernel: tpu_custom_call.1
$region0: #{tpu_custom_call.1}
  #allocation0 [shape = 'u32[]', space=smem, size = 0x4, offset = 0x4, fixed_abs, tag = 'smem constant byte address 0x4 - core index']
  #allocation1 [shape = 'u32[144,128]{1,0:T(1,128)}', space=vmem, size = 0x12000, scoped, tag = 'internal scratch']
  %s0 = inlined_call_operand.hbm [shape: f32[2,8,32], index: 0, kind: input, shape index: {}]
  %s1 = inlined_call_operand.hbm [shape: bf16[32,96], index: 1, kind: input, shape index: {}]
  %s2 = inlined_call_operand.hbm [shape: bf16[2,8,32], index: 2, kind: output, shape index: {0}]
  %s3 = inlined_call_operand.hbm [shape: bf16[2,8,64], index: 3, kind: output, shape index: {1}]
  %4 = xla_tuple %s2, %s3
  %s5 = sld [smem:[#allocation0]]
  $region57: #{tpu_custom_call.1} parent=0
    _
  %s7 = ssub.s32 1, %s5
  %s8 = scalar_select 0, %s7, %s5
  $region1: #{tpu_custom_call.1} parent=0
    #allocation2 [shape = 'u8[8192]{0}', space=vmem, size = 0x2000, scoped, tag = 'input window, operand 0']
    #allocation3 [shape = 's32[2]{0}', space=sflag, size = 0x8, scoped, tag = 'scoped memory for tpu_custom_call.1']
    #allocation4 [shape = 's32[2]{0}', space=sflag, size = 0x8, scoped, tag = 'scoped memory for tpu_custom_call.1']
    #allocation5 [shape = 'u8[8192]{0}', space=vmem, size = 0x2000, scoped, tag = 'input window, operand 1, single buffered']
    #allocation6 [shape = 's32[1]{0}', space=sflag, size = 0x4, scoped, tag = 'scoped memory for tpu_custom_call.1']
    #allocation7 [shape = 'u8[4096]{0}', space=vmem, size = 0x1000, scoped, tag = 'output window, operand 0']
    #allocation8 [shape = 'u8[4096]{0}', space=vmem, size = 0x1000, scoped, tag = 'output window, operand 1']
    #allocation9 [shape = 's32[2]{0}', space=sflag, size = 0x8, scoped, tag = 'scoped memory for tpu_custom_call.1']
    %9 = vsyncpa [#allocation3], 0
    %s10 = scalar_lea.sflag [#allocation3], 1
    %11 = vsyncpa %s10, 0
    %12 = vsyncpa [#allocation6], 0
    %13 = vsyncpa [#allocation4], 0
    %s14 = scalar_lea.sflag [#allocation4], 1
    %15 = vsyncpa %s14, 0
    %16 = vsyncpa [#allocation9], 0
    %s17 = scalar_lea.sflag [#allocation9], 1
    %18 = vsyncpa %s17, 0
    loop: start=0, step=1, limit=4
    $region2: #{tpu_custom_call.1} parent=1 // loop_pre_header
      _
    $region3: #{tpu_custom_call.1} parent=1 // loop_header
      %s20 = sphi 0, %s24
      %p21 = scmp.ge.s32.totalorder %s20, 4
      %s27 = sphi 0, %s39
      %s28 = sphi 0, %s35
      %s29 = sphi 0, %s27
      %s30 = sphi 0, %s28
      %s31 = sphi 0, %s29
      %s32 = sphi 0, %s30
      %s44 = sphi 0, %s46
      %s47 = sphi 0, %s44
      %s48 = sphi 0, %s47
      %s64 = sphi 0, %s48
      %s68 = sphi 0, %s68
      %s70 = sphi 0, %s68
      %s71 = sphi 0, %s70
      %s85 = sphi 0, %s71
      %s93 = sphi 0, %s95
      %s96 = sphi 0, %s93
      %s97 = sphi 0, %s96
      %s113 = sphi 0, %s97
      %s121 = sphi 0, %s123
      %s124 = sphi 0, %s121
      %s125 = sphi 0, %s124
      %s141 = sphi 0, %s125
    $region4: #{tpu_custom_call.1} parent=1 // loop_header_branch
      %23 = sbr.rel (%p21) target = $region8
    $region5: #{tpu_custom_call.1} parent=1 // loop_body
      %s25 = ssub.s32 %s20, 1
      %s26 = ssub.s32 %s20, 2
      %s33 = sadd.s32 1, %s28
      %p34 = scmp.ge.s32.totalorder %s33, 1
      %s35 = scalar_select %p34, 0, %s33
      %s36 = sadd.s32 1, %s27
      %s37 = scalar_select %p34, %s36, %s27
      %p38 = scmp.ge.s32.totalorder %s37, 2
      %s39 = scalar_select %p38, 0, %s37
      %s40 = ssub.s32 %s27, %s39
      %s41 = ssub.s32 %s28, %s35
      %s42 = sor.u32 %s40, %s41
      %p43 = scmp.eq.s32.totalorder %s42, 0
      %s45 = sadd.s32 %s44, 1
      %s46 = scalar_select %p43, %s44, %s45
      %p49 = pneg %p43
      %p50 = scmp.eq.s32.totalorder %s20, 1
      %p51 = por %p49, %p50
      %p52 = scmp.ne.s32.totalorder %s44, %s47
      %p53 = scmp.eq.s32.totalorder %s20, 0
      %p54 = por %p52, %p53
      %p55 = scmp.ne.s32.totalorder %s44, %s47
      %p56 = scmp.eq.s32.totalorder %s25, 1
      %p57 = por %p55, %p56
      %p58 = scmp.ne.s32.totalorder %s47, %s48
      %p59 = scmp.eq.s32.totalorder %s25, 0
      %p60 = por %p58, %p59
      %p61 = scmp.ne.s32.totalorder %s47, %s48
      %p62 = scmp.eq.s32.totalorder %s26, 1
      %p63 = por %p61, %p62
      %p65 = scmp.ne.s32.totalorder %s48, %s64
      %p66 = scmp.eq.s32.totalorder %s26, 0
      %p67 = por %p65, %p66
      %s69 = sadd.s32 %s68, 1
      %p72 = scmp.eq.s32.totalorder %s20, 1
      %p73 = scmp.ne.s32.totalorder %s68, %s70
      %p74 = scmp.eq.s32.totalorder %s20, 0
      %p75 = por %p73, %p74
      %p76 = scmp.ne.s32.totalorder %s68, %s70
      %p77 = scmp.eq.s32.totalorder %s25, 1
      %p78 = por %p76, %p77
      %p79 = scmp.ne.s32.totalorder %s70, %s71
      %p80 = scmp.eq.s32.totalorder %s25, 0
      %p81 = por %p79, %p80
      %p82 = scmp.ne.s32.totalorder %s70, %s71
      %p83 = scmp.eq.s32.totalorder %s26, 1
      %p84 = por %p82, %p83
      %p86 = scmp.ne.s32.totalorder %s71, %s85
      %p87 = scmp.eq.s32.totalorder %s26, 0
      %p88 = por %p86, %p87
      %s89 = ssub.s32 %s27, %s39
      %s90 = ssub.s32 %s28, %s35
      %s91 = sor.u32 %s89, %s90
      %p92 = scmp.eq.s32.totalorder %s91, 0
      %s94 = sadd.s32 %s93, 1
      %s95 = scalar_select %p92, %s93, %s94
      %p98 = pneg %p92
      %p99 = scmp.eq.s32.totalorder %s20, 1
      %p100 = por %p98, %p99
      %p101 = scmp.ne.s32.totalorder %s93, %s96
      %p102 = scmp.eq.s32.totalorder %s20, 0
      %p103 = por %p101, %p102
      %p104 = scmp.ne.s32.totalorder %s93, %s96
      %p105 = scmp.eq.s32.totalorder %s25, 1
      %p106 = por %p104, %p105
      %p107 = scmp.ne.s32.totalorder %s96, %s97
      %p108 = scmp.eq.s32.totalorder %s25, 0
      %p109 = por %p107, %p108
      %p110 = scmp.ne.s32.totalorder %s96, %s97
      %p111 = scmp.eq.s32.totalorder %s26, 1
      %p112 = por %p110, %p111
      %p114 = scmp.ne.s32.totalorder %s97, %s113
      %p115 = scmp.eq.s32.totalorder %s26, 0
      %p116 = por %p114, %p115
      %s117 = ssub.s32 %s27, %s39
      %s118 = ssub.s32 %s28, %s35
      %s119 = sor.u32 %s117, %s118
      %p120 = scmp.eq.s32.totalorder %s119, 0
      %s122 = sadd.s32 %s121, 1
      %s123 = scalar_select %p120, %s121, %s122
      %p126 = pneg %p120
      %p127 = scmp.eq.s32.totalorder %s20, 1
      %p128 = por %p126, %p127
      %p129 = scmp.ne.s32.totalorder %s121, %s124
      %p130 = scmp.eq.s32.totalorder %s20, 0
      %p131 = por %p129, %p130
      %p132 = scmp.ne.s32.totalorder %s121, %s124
      %p133 = scmp.eq.s32.totalorder %s25, 1
      %p134 = por %p132, %p133
      %p135 = scmp.ne.s32.totalorder %s124, %s125
      %p136 = scmp.eq.s32.totalorder %s25, 0
      %p137 = por %p135, %p136
      %p138 = scmp.ne.s32.totalorder %s124, %s125
      %p139 = scmp.eq.s32.totalorder %s26, 1
      %p140 = por %p138, %p139
      %p142 = scmp.ne.s32.totalorder %s125, %s141
      %p143 = scmp.eq.s32.totalorder %s26, 0
      %p144 = por %p142, %p143
      %p145 = scmp.le.s32.totalorder 1, %s20
      %p146 = scmp.lt.s32.totalorder %s20, 3
      %p147 = pnand %p145, %p146
      %p148 = pneg %p147
      // Predicated region
      $region9: #{tpu_custom_call.1} parent=5 // pred_check
        _
      $region10: #{tpu_custom_call.1} parent=5 // pred_check_branch
        %150 = sbr.rel (%p147) target = $region12
      $region11: #{tpu_custom_call.1} parent=5 // pred_region
        %s151 = ssub.s32 %s20, 1
        // Predicated region
        $region13: #{tpu_custom_call.1} parent=11 // pred_check
          %p152 = pneg %p81
        $region14: #{tpu_custom_call.1} parent=11 // pred_check_branch
          %154 = sbr.rel (%p152) target = $region16
        $region15: #{tpu_custom_call.1} parent=11 // pred_region
          %s156 = ssub.s32 256, 256
          %157 = vsyncadd [#allocation6], %s156
          %s158 = sshll.u32 [#allocation5], 4
          %s159 = int_to_ptr.vmem [resolvable:$true] %s158
          %164 = dma.hbm_to_vmem [thread:$0]  %s1, 256, %s159, [#allocation6], 64, 64, 4
        $region16: #{tpu_custom_call.1} parent=11 // pred_fallthru
          _
      $region12: #{tpu_custom_call.1} parent=5 // pred_fallthru
        _
      %p165 = scmp.lt.s32.totalorder %s20, 2
      // Predicated region
      $region17: #{tpu_custom_call.1} parent=5 // pred_check
        %p166 = pneg %p165
      $region18: #{tpu_custom_call.1} parent=5 // pred_check_branch
        %168 = sbr.rel (%p166) target = $region20
      $region19: #{tpu_custom_call.1} parent=5 // pred_region
        // Predicated region
        $region21: #{tpu_custom_call.1} parent=19 // pred_check
          %p169 = pneg %p54
        $region22: #{tpu_custom_call.1} parent=19 // pred_check_branch
          %171 = sbr.rel (%p169) target = $region24
        $region23: #{tpu_custom_call.1} parent=19 // pred_region
          %s172 = sand.u32 %s44, 1
          %s173 = scalar_lea.sflag [#allocation3], %s172
          %s174 = sand.u32 %s44, 1
          %s175 = smul.addr %s174, 8
          %s176 = scalar_lea.vmem [#allocation2], %s175
          %s178 = ssub.s32 128, 128
          %179 = vsyncadd %s173, %s178
          %s180 = sadd.s32 %s28, %s27
          %s181 = smul.addr %s180, 128
          %s182 = scalar_lea.hbm %s0, %s181
          %s184 = sshll.u32 %s176, 4
          %s185 = int_to_ptr.vmem [resolvable:$true] %s184
          %187 = dma.hbm_to_vmem [thread:$0]  %s182, 128, %s185, %s173
        $region24: #{tpu_custom_call.1} parent=19 // pred_fallthru
          _
      $region20: #{tpu_custom_call.1} parent=5 // pred_fallthru
        _
      %p188 = scmp.le.s32.totalorder 1, %s20
      %p189 = scmp.lt.s32.totalorder %s20, 3
      %p190 = pnand %p188, %p189
      %p191 = pneg %p190
      // Predicated region
      $region25: #{tpu_custom_call.1} parent=5 // pred_check
        _
      $region26: #{tpu_custom_call.1} parent=5 // pred_check_branch
        %193 = sbr.rel (%p190) target = $region28
      $region27: #{tpu_custom_call.1} parent=5 // pred_region
        %s194 = ssub.s32 %s20, 1
        %s195 = sand.u32 %s47, 1
        %s196 = scalar_lea.sflag [#allocation3], %s195
        %s197 = sand.u32 %s47, 1
        %s198 = smul.addr %s197, 8
        %s199 = scalar_lea.vmem [#allocation2], %s198
        // Predicated region
        $region29: #{tpu_custom_call.1} parent=27 // pred_check
          %p200 = pneg %p60
        $region30: #{tpu_custom_call.1} parent=27 // pred_check_branch
          %202 = sbr.rel (%p200) target = $region32
        $region31: #{tpu_custom_call.1} parent=27 // pred_region
          %203 = dma.done %s196, 128
        $region32: #{tpu_custom_call.1} parent=27 // pred_fallthru
          _
        // Predicated region
        $region33: #{tpu_custom_call.1} parent=27 // pred_check
          %p204 = pneg %p81
        $region34: #{tpu_custom_call.1} parent=27 // pred_check_branch
          %206 = sbr.rel (%p204) target = $region36
        $region35: #{tpu_custom_call.1} parent=27 // pred_region
          %207 = dma.done [#allocation6], 256
        $region36: #{tpu_custom_call.1} parent=27 // pred_fallthru
          _
        %s208 = sand.u32 %s47, 1
        %s209 = scalar_lea.sflag [#allocation3], %s208
        %s210 = sand.u32 %s47, 1
        %s211 = smul.addr %s210, 8
        %s212 = scalar_lea.vmem [#allocation2], %s211
        %p213 = pneg %p60
        %p214 = pneg %p57
        %p215 = pneg %p81
        %p216 = pneg %p78
        %p217 = pneg %p109
        %p218 = pneg %p106
        %s219 = sand.u32 %s96, 1
        %s220 = scalar_lea.sflag [#allocation4], %s219
        %s221 = sand.u32 %s96, 1
        %s222 = smul.addr %s221, 4
        %s223 = scalar_lea.vmem [#allocation7], %s222
        %p224 = pneg %p137
        %p225 = pneg %p134
        %s226 = sand.u32 %s124, 1
        %s227 = scalar_lea.sflag [#allocation9], %s226
        %s228 = sand.u32 %s124, 1
        %s229 = smul.addr %s228, 4
        %s230 = scalar_lea.vmem [#allocation8], %s229
        %v232 = vld [vmem:[%s199] sm:$0xff]
        %v233 = vpack.c.bf16 %v232, %v232
        %v234 = vld [vmem:[#allocation5] sm:$0xf]
        %v235 = vld [vmem:[#allocation5 + $0x4] sm:$0xf]
        %v236 = vld [vmem:[#allocation5 + $0x8] sm:$0xf]
        %v237 = vld [vmem:[#allocation5 + $0xc] sm:$0xf]
        %v242 = vunpack.c.l.b16 %v234
        %v243 = vunpack.c.l.b16 %v235
        %v244 = vunpack.c.l.b16 %v236
        %v245 = vunpack.c.l.b16 %v237
        %v246 = vpack.c.b16 %v243, %v242
        %v247 = vpack.c.b16 %v245, %v244
        %vm250 = vcmask 261120
        %v252 = vsel %vm250, %v233, 0
        %254 = vmatprep.subr.bf16.mxu0 0
        %255 = vmatpush1.bf16.msra.mxu0 %v246
        %256 = vmatprep.subr.bf16.mxu0 0
        %257 = vmatpush1.bf16.msra.mxu0 %v247
        %258 = vmatprep.subr.bf16.mxu0 0
        %259 = vmatpush1.bf16.msra.mxu0 0
        %260 = vmatprep.subr.bf16.mxu0 0
        %261 = vmatpush1.bf16.msra.mxu0 0
        %262 = vmatprep.subr.bf16.mxu0 0
        %263 = vmatpush1.bf16.msra.mxu0 0
        %264 = vmatprep.subr.bf16.mxu0 0
        %265 = vmatpush1.bf16.msra.mxu0 0
        %266 = vmatprep.subr.bf16.mxu0 0
        %267 = vmatpush1.bf16.msra.mxu0 0
        %268 = vmatprep.subr.bf16.mxu0 0
        %269 = vmatpush1.bf16.msra.mxu0 0
        %270 = vmatprep.subr.bf16.mxu0 0
        %271 = vmatpush1.bf16.msra.mxu0 0
        %272 = vmatprep.subr.bf16.mxu0 0
        %273 = vmatpush1.bf16.msra.mxu0 0
        %274 = vmatprep.subr.bf16.mxu0 0
        %275 = vmatpush1.bf16.msra.mxu0 0
        %276 = vmatprep.subr.bf16.mxu0 0
        %277 = vmatpush1.bf16.msra.mxu0 0
        %278 = vmatprep.subr.bf16.mxu0 0
        %279 = vmatpush1.bf16.msra.mxu0 0
        %280 = vmatprep.subr.bf16.mxu0 0
        %281 = vmatpush1.bf16.msra.mxu0 0
        %282 = vmatprep.subr.bf16.mxu0 0
        %283 = vmatpush1.bf16.msra.mxu0 0
        %284 = vmatprep.subr.bf16.mxu0 0
        %285 = vmatpush1.bf16.msra.mxu0 0
        %286 = vmatprep.mubr.bf16.mxu0 0
        %287 = vmatmul.mubr.bf16.gmra.mrb[0].mxu0 %v252
        %v288 = vpop.f32.mrb[0].mxu0
        %v289 = vadd.f32 0.0, %v288
        %v290 = vpop.f32.mrb[0].mxu0
        %v291 = vpop.f32.mrb[0].mxu0
        %v292 = vpop.f32.mrb[0].mxu0
        %293 = vdwg.mxu0
        %v294 = vpack.c.bf16 %v289, %v289
        %vm295 = vcmask 257024
        %296 = vst.msk [vmem:[%s223] sm:$0xf] %vm295, %v294
        %v298 = vunpack.c.l.b16 %v294
        %v299 = vpack.c.b16 %v298, %v298
        %300 = vrot.lane.b32.xlu0 %v299, 96
        %v301 = vpop.permute.xlu0 %300
        %vm303 = vcmask 519168
        %304 = vst.msk [vmem:[%s230] sm:$0xf] %vm303, %v301
        %s305 = sand.u32 %s96, 1
        %s306 = scalar_lea.sflag [#allocation4], %s305
        %s307 = sand.u32 %s96, 1
        %s308 = smul.addr %s307, 4
        %s309 = scalar_lea.vmem [#allocation7], %s308
        %s310 = sand.u32 %s124, 1
        %s311 = scalar_lea.sflag [#allocation9], %s310
        %s312 = sand.u32 %s124, 1
        %s313 = smul.addr %s312, 4
        %s314 = scalar_lea.vmem [#allocation8], %s313
        // Predicated region
        $region37: #{tpu_custom_call.1} parent=27 // pred_check
          %p315 = pneg %p106
        $region38: #{tpu_custom_call.1} parent=27 // pred_check_branch
          %317 = sbr.rel (%p315) target = $region40
        $region39: #{tpu_custom_call.1} parent=27 // pred_region
          %s319 = ssub.s32 64, 64
          %320 = vsyncadd %s306, %s319
          %s321 = sadd.s32 %s30, %s29
          %s322 = smul.addr %s321, 64
          %s323 = scalar_lea.hbm %s2, %s322
          %s325 = sshll.u32 %s309, 4
          %s326 = int_to_ptr.vmem [resolvable:$true] %s325
          %328 = dma.vmem_to_hbm [thread:$0]  %s326, 64, %s323, %s306
        $region40: #{tpu_custom_call.1} parent=27 // pred_fallthru
          _
        // Predicated region
        $region41: #{tpu_custom_call.1} parent=27 // pred_check
          %p329 = pneg %p134
        $region42: #{tpu_custom_call.1} parent=27 // pred_check_branch
          %331 = sbr.rel (%p329) target = $region44
        $region43: #{tpu_custom_call.1} parent=27 // pred_region
          %s333 = ssub.s32 64, 64
          %334 = vsyncadd %s311, %s333
          %s335 = sadd.s32 %s30, %s29
          %s336 = smul.addr %s335, 64
          %s337 = scalar_lea.hbm %s3, %s336
          %s339 = sshll.u32 %s314, 4
          %s340 = int_to_ptr.vmem [resolvable:$true] %s339
          %342 = dma.vmem_to_hbm [thread:$0]  %s340, 64, %s337, %s311
        $region44: #{tpu_custom_call.1} parent=27 // pred_fallthru
          _
      $region28: #{tpu_custom_call.1} parent=5 // pred_fallthru
        _
      %p343 = scmp.le.s32.totalorder 2, %s20
      // Predicated region
      $region45: #{tpu_custom_call.1} parent=5 // pred_check
        %p344 = pneg %p343
      $region46: #{tpu_custom_call.1} parent=5 // pred_check_branch
        %346 = sbr.rel (%p344) target = $region48
      $region47: #{tpu_custom_call.1} parent=5 // pred_region
        %s347 = ssub.s32 %s20, 2
        // Predicated region
        $region49: #{tpu_custom_call.1} parent=47 // pred_check
          %p348 = pneg %p112
        $region50: #{tpu_custom_call.1} parent=47 // pred_check_branch
          %350 = sbr.rel (%p348) target = $region52
        $region51: #{tpu_custom_call.1} parent=47 // pred_region
          %s351 = sand.u32 %s97, 1
          %s352 = scalar_lea.sflag [#allocation4], %s351
          %s353 = sand.u32 %s97, 1
          %s354 = smul.addr %s353, 4
          %s355 = scalar_lea.vmem [#allocation7], %s354
          %356 = dma.done %s352, 64
        $region52: #{tpu_custom_call.1} parent=47 // pred_fallthru
          _
        // Predicated region
        $region53: #{tpu_custom_call.1} parent=47 // pred_check
          %p357 = pneg %p140
        $region54: #{tpu_custom_call.1} parent=47 // pred_check_branch
          %359 = sbr.rel (%p357) target = $region56
        $region55: #{tpu_custom_call.1} parent=47 // pred_region
          %s360 = sand.u32 %s125, 1
          %s361 = scalar_lea.sflag [#allocation9], %s360
          %s362 = sand.u32 %s125, 1
          %s363 = smul.addr %s362, 4
          %s364 = scalar_lea.vmem [#allocation8], %s363
          %365 = dma.done %s361, 64
        $region56: #{tpu_custom_call.1} parent=47 // pred_fallthru
          _
      $region48: #{tpu_custom_call.1} parent=5 // pred_fallthru
        _
    $region6: #{tpu_custom_call.1} parent=1 // loop_footer
      %s24 = sadd.s32 1, %s20
    $region7: #{tpu_custom_call.1} parent=1 // loop_footer_branch
      %19 = sbr.rel target = $region3
    $region8: #{tpu_custom_call.1} parent=1 // loop_exit
      _
    %366 = vsyncpa [#allocation3], 1
    %s367 = scalar_lea.sflag [#allocation3], 1
    %368 = vsyncpa %s367, 1
    %369 = vsyncpa [#allocation6], 1
    %370 = vsyncpa [#allocation4], 1
    %s371 = scalar_lea.sflag [#allocation4], 1
    %372 = vsyncpa %s371, 1
    %373 = vsyncpa [#allocation9], 1
    %s374 = scalar_lea.sflag [#allocation9], 1
    %375 = vsyncpa %s374, 1

</llo_original>
